<compile_context>
chip_gen: v6e
topology: v6e:2x2x1
jax: 0.10.0
libtpu: 0.0.40
codegen_flags: <defaults>
</compile_context>

<pallas_src>
import jax
import jax.numpy as jnp
from jax.experimental import pallas as pl
from jax.experimental.pallas import tpu as pltpu


def _ret_scalar_kernel(ret_ref, a_ref):
    # a = torch.tensor(ret_val): single SMEM word copy. The output buffer is
    # aliased to the input (input_output_aliases={0: 0}); the assignment keeps
    # the data dependence explicit and is correct whether or not XLA elides it.
    a_ref[0] = ret_ref[0]


def model_ret_tuple_forward(x: jax.Array, ret_val):
    """Pallas equivalent of ModelRetTuple.forward.

    Args:
      x: input array (any shape / dtype) — passed through untouched.
      ret_val: Python scalar (cast to float32, like torch.tensor(0.5)) or a
        device-resident jax.Array / traced value (used as-is, no H2D transfer,
        jit-friendly: one trace serves every value).

    Returns:
      (a, x): a is a 0-d array equal to ret_val; x is the input, unchanged.
    """
    if isinstance(ret_val, jax.Array):          # device-resident / traced: no transfer
        ret_arr = ret_val.reshape((1,))
    else:
        # TODO(synk): torch.tensor(int) would be int64; JAX/TPU defaults to 32-bit.
        ret_arr = jnp.asarray(ret_val, dtype=jnp.float32).reshape((1,))

    a1 = pl.pallas_call(
        _ret_scalar_kernel,
        out_shape=jax.ShapeDtypeStruct((1,), ret_arr.dtype),
        in_specs=[pl.BlockSpec(memory_space=pltpu.MemorySpace.SMEM)],
        out_specs=pl.BlockSpec(memory_space=pltpu.MemorySpace.SMEM),
        input_output_aliases={0: 0},
        cost_estimate=pl.CostEstimate(flops=0, transcendentals=0, bytes_accessed=8),
    )(ret_arr)

    a = a1.reshape(())  # 0-d scalar, mirrors torch.tensor(ret_val)
    # TODO(synk): a.requires_grad = True has no JAX-array equivalent (autograd flag only).
    return a, x         # x returned directly: zero extra kernel work, zero data movement


if __name__ == "__main__":
    key = jax.random.PRNGKey(0)

    # Deterministic parameter init (unused by forward; matches nn.Parameter(zeros(10)))
    w = jnp.zeros((10,), dtype=jnp.float32)

    # Example input: NCHW [2, 4, 16, 16]
    x = jax.random.normal(key, (2, 4, 16, 16), dtype=jnp.float32)

    # (1) Python-scalar ret_val (one-time 4-byte H2D, like torch.tensor(0.5))
    a, y = model_ret_tuple_forward(x, 0.5)
    a, y = jax.block_until_ready((a, y))
    assert a.shape == () and a.dtype == jnp.float32 and float(a) == 0.5
    assert y.shape == x.shape and y.dtype == x.dtype
    assert bool(jnp.all(y == x))

    # (2) device-resident ret_val: no per-call host->device transfer; the same
    #     compiled kernel serves every value (runtime SMEM operand).
    ret_dev = jnp.asarray(-3.25, dtype=jnp.float32)
    a2, _ = model_ret_tuple_forward(x, ret_dev)
    assert float(jax.block_until_ready(a2)) == -3.25

    # (3) jit-compatible: ret_val as a traced array argument -> a single
    #     executable for all values (no constant-folding / retrace per value).
    fwd = jax.jit(model_ret_tuple_forward)
    a3, y3 = fwd(x, jnp.asarray(7.0, dtype=jnp.float32))
    a3, y3 = jax.block_until_ready((a3, y3))
    assert float(a3) == 7.0 and bool(jnp.all(y3 == x))

    assert w.shape == (10,)
    print("KERNEL_OK")
</pallas_src>

<mosaic_0001>
module attributes {stable_mosaic.version = 11 : i64} {
  func.func @_ret_scalar_kernel(%arg0: memref<1xf32, #tpu.memory_space<smem>>, %arg1: memref<1xf32, #tpu.memory_space<smem>>) attributes {dimension_semantics = [], scalar_prefetch = 0 : i64, scratch_operands = 0 : i64, tpu.core_type = #tpu.core_type<tc>} {
    %c0 = arith.constant 0 : index
    %0 = memref.load %arg0[%c0] : memref<1xf32, #tpu.memory_space<smem>>
    %c0_0 = arith.constant 0 : index
    %1 = memref.load %arg1[%c0_0] : memref<1xf32, #tpu.memory_space<smem>>
    memref.store %0, %arg1[%c0_0] : memref<1xf32, #tpu.memory_space<smem>>
    return
  }
}

</mosaic_0001>

<llo_original>
// kernel: tpu_custom_call.1
$region0: #{tpu_custom_call.1}
  #allocation0 [shape = 'u32[]', space=smem, size = 0x4, offset = 0x4, fixed_abs, tag = 'smem constant byte address 0x4 - core index']
  #allocation1 [shape = 'u32[144,128]{1,0:T(1,128)}', space=vmem, size = 0x12000, scoped, tag = 'internal scratch']
  #allocation2 [shape = 'f32[1]{0:T(128)S(6)}', space=smem, size = 0x200, scoped, tag = 'scoped memory for tpu_custom_call.1']
  %s0 = inlined_call_operand.<no memory space> [shape: f32[1], index: 0, kind: input, shape index: {}, may-alias: {0,1}]
  %s1 = inlined_call_operand.hbm [shape: f32[1], index: 1, kind: output, shape index: {}, may-alias: {0,1}]
  %s2 = sld [smem:[#allocation0]]
  $region14: #{tpu_custom_call.1} parent=0
    _
  %s4 = ssub.s32 1, %s2
  %s5 = scalar_select 0, %s4, %s2
  %6 = sst [smem:[#allocation2]] %s0
  $region1: #{tpu_custom_call.1} parent=0
    #allocation3 [shape = 'u8[512]{0}', space=smem, size = 0x200, scoped, tag = 'output window, operand 0, single buffered']
    #allocation4 [shape = 's32[1]{0}', space=sflag, size = 0x4, scoped, tag = 'scoped memory for tpu_custom_call.1']
    %7 = vsyncpa [#allocation4], 0
    // Predicated region
    $region2: #{tpu_custom_call.1} parent=1 // pred_check
      _
    $region3: #{tpu_custom_call.1} parent=1 // pred_check_branch
      %9 = sbr.rel (0) target = $region5
    $region4: #{tpu_custom_call.1} parent=1 // pred_region
      _
    $region5: #{tpu_custom_call.1} parent=1 // pred_fallthru
      _
    %s10 = sld [smem:[#allocation2]]
    %s11 = scalar_lea.smem [#allocation3], 0
    %12 = sst [smem:[%s11]] %s10
    // Predicated region
    $region6: #{tpu_custom_call.1} parent=1 // pred_check
      _
    $region7: #{tpu_custom_call.1} parent=1 // pred_check_branch
      %14 = sbr.rel (0) target = $region9
    $region8: #{tpu_custom_call.1} parent=1 // pred_region
      %s16 = ssub.s32 16, 16
      %17 = vsyncadd [#allocation4], %s16
      %20 = dma.smem_to_hbm [#allocation3], 16, %s1, [#allocation4]
    $region9: #{tpu_custom_call.1} parent=1 // pred_fallthru
      _
    // Predicated region
    $region10: #{tpu_custom_call.1} parent=1 // pred_check
      _
    $region11: #{tpu_custom_call.1} parent=1 // pred_check_branch
      %22 = sbr.rel (0) target = $region13
    $region12: #{tpu_custom_call.1} parent=1 // pred_region
      %23 = dma.done [#allocation4], 16
    $region13: #{tpu_custom_call.1} parent=1 // pred_fallthru
      _
    %24 = sfence
    %25 = vsyncpa [#allocation4], 1

</llo_original>
